<compile_context>
chip_gen: v7x
topology: tpu7x:2x2x1
jax: 0.10.0
libtpu: 0.0.40
codegen_flags: <defaults>
</compile_context>

<pallas_src>
import jax
import jax.numpy as jnp
from jax import lax
from jax.experimental import pallas as pl
from jax.experimental.pallas import tpu as pltpu


def _round_up(x, m):
    return ((x + m - 1) // m) * m


def _cdiv(a, b):
    return (a + b - 1) // b


def _sigmoid(x):
    # EUP-friendly sigmoid: tanh runs on the EUP slot, no VPU divide.
    return 0.5 * jnp.tanh(0.5 * x) + 0.5


def _make_dae_kernel(n_layers, enc_bias, dec_bias, mxu_dtype):
    """Fused DAE forward kernel for a fixed RBM stack.

    enc_bias / dec_bias: lists of (offset, width) static slices into the packed
    bias row, in encode order / decode (reversed) order.

    Ref layout per grid step:
      [0]        : v tile        (TB, Dp0)
      [1 .. n]   : encoder W_i   (Dp_i, Dp_{i+1})   (mxu_dtype)
      [n+1]      : packed biases (1, sum_D)         (f32)
      [-1]       : output tile   (TB, Dp0)
    """
    acc_dtype = jnp.float32
    # x @ W^T : contract x's last dim with W's last dim (no transposed copy).
    contract_last = (((1,), (1,)), ((), ()))

    def kernel(*refs):
        v_ref = refs[0]
        enc_w = refs[1:1 + n_layers]
        bias_ref = refs[1 + n_layers]
        out_ref = refs[-1]

        # ---- encode ----
        x = v_ref[...]
        act = None
        for i in range(n_layers):
            off, width = enc_bias[i]
            acc = jnp.dot(x.astype(mxu_dtype), enc_w[i][...],
                          preferred_element_type=acc_dtype)
            act = acc + bias_ref[:, off:off + width]          # f32 accumulator
            if i + 1 < n_layers:
                # inter-layer activation stored in the MXU dtype
                x = _sigmoid(act).astype(mxu_dtype)
            # The final encoder sigmoid is never used (decode starts from the
            # pre-sigmoid activation), so it is skipped.

        # ---- decode (seed = pre-sigmoid last encoder activation, f32) ----
        h = act
        for j in range(n_layers):
            w = enc_w[n_layers - 1 - j]                       # reversed, used as W^T
            off, width = dec_bias[j]
            acc = lax.dot_general(h.astype(mxu_dtype), w[...],
                                  dimension_numbers=contract_last,
                                  preferred_element_type=acc_dtype)
            a = acc + bias_ref[:, off:off + width]
            if j + 1 < n_layers:
                h = _sigmoid(a).astype(mxu_dtype)
            else:
                out_ref[...] = _sigmoid(a).astype(out_ref.dtype)

    return kernel


def _vmem_budget_bytes():
    """Per-core VMEM budget derived from device kind (v7x has 64 MiB)."""
    try:
        kind = jax.devices()[0].device_kind.lower()
    except Exception:
        kind = ""
    if "v7" in kind:
        return 56 * 1024 * 1024       # headroom inside v7x's 64 MiB
    return 100 * 1024 * 1024          # v5e / v6e: 128 MiB physical


def dae_forward(v, enc_Ws, h_biases, v_biases, *, batch_tile=256,
                mxu_dtype=jnp.bfloat16):
    """Fused DAE forward pass (single pallas_call, batch-tiled grid).

    enc_Ws[i]   : (D_i, D_{i+1})  encoder weights (decoder reuses them transposed,
                                  matching the PyTorch module's cloned W)
    h_biases[i] : (D_{i+1},)      hidden biases
    v_biases[i] : (D_i,)          visible biases
    """
    n = len(enc_Ws)
    B, D0 = v.shape
    dims = [enc_Ws[0].shape[0]] + [w.shape[1] for w in enc_Ws]
    assert dims[0] == D0

    # ---- feature-dim zero padding to multiples of 128 (lane-dense) ----
    dp = [_round_up(d, 128) for d in dims]

    Wp = [
        jnp.pad(w, ((0, dp[i] - dims[i]), (0, dp[i + 1] - dims[i + 1])))
        .astype(mxu_dtype)
        for i, w in enumerate(enc_Ws)
    ]
    v_in = jnp.pad(v, ((0, 0), (0, dp[0] - D0))) if dp[0] != D0 else v

    # ---- pack all 2n bias rows into one lane-aligned f32 row ----
    segs, enc_bias, dec_bias, off = [], [], [], 0
    for i in range(n):
        segs.append(jnp.pad(h_biases[i].astype(jnp.float32),
                            (0, dp[i + 1] - dims[i + 1])))
        enc_bias.append((off, dp[i + 1]))
        off += dp[i + 1]
    for j in range(n):
        i = n - 1 - j
        segs.append(jnp.pad(v_biases[i].astype(jnp.float32),
                            (0, dp[i] - dims[i])))
        dec_bias.append((off, dp[i]))
        off += dp[i]
    bias_packed = jnp.concatenate(segs).reshape(1, -1)

    # ---- batch tile selection (no host pad; grid handles the boundary) ----
    TB = min(batch_tile, _round_up(B, 8))
    n_tiles = _cdiv(B, TB)
    if n_tiles == 1 and TB >= 256:
        # guarantee >= 2 grid steps so the "parallel" axis can use both v7x cores
        TB = max(128, _round_up(TB // 2, 8))
        n_tiles = _cdiv(B, TB)

    budget = _vmem_budget_bytes()
    w_bytes = sum(dp[i] * dp[i + 1] for i in range(n)) * jnp.dtype(mxu_dtype).itemsize
    bias_bytes = 8 * bias_packed.shape[1] * 4          # sublane-padded to 8 rows

    def _est(tb):
        io = 2 * 2 * tb * dp[0] * 4                    # in + out tiles, double-buffered
        act = 4 * tb * max(dp) * 4                     # live activations / accumulators
        return w_bytes + bias_bytes + io + act

    while _est(TB) > budget and TB > 8:
        TB = max(8, _round_up(TB // 2, 8))
    n_tiles = _cdiv(B, TB)

    args = [v_in, *Wp, bias_packed]

    def _batch_map(b):
        return (b, 0)

    def _const_map(b):
        return (0, 0)

    def _call(single_buffer_consts):
        const_kw = (dict(pipeline_mode=pl.Buffered(1))
                    if single_buffer_consts else {})
        in_specs = [pl.BlockSpec((TB, dp[0]), _batch_map)]
        in_specs += [pl.BlockSpec(a.shape, _const_map, **const_kw)
                     for a in args[1:]]
        out_spec = pl.BlockSpec((TB, dp[0]), _batch_map)
        kernel = _make_dae_kernel(n, enc_bias, dec_bias, mxu_dtype)
        return pl.pallas_call(
            kernel,
            out_shape=jax.ShapeDtypeStruct((B, dp[0]), v.dtype),
            grid_spec=pl.GridSpec(
                grid=(n_tiles,),
                in_specs=in_specs,
                out_specs=out_spec),
            compiler_params=pltpu.CompilerParams(
                dimension_semantics=("parallel",),      # megacore on v7x
                vmem_limit_bytes=budget),
        )(*args)

    try:
        # single-buffer the never-revisited weight/bias blocks (halves their VMEM)
        out = _call(True)
    except Exception:
        # Fallback for JAX builds without BlockSpec pipeline_mode support.
        out = _call(False)

    if dp[0] != D0:
        out = out[:, :D0]
    return out


def dae_reference(v, enc_Ws, h_biases, v_biases):
    """Pure-JAX f32 reference mirroring PyTorch DAE.forward semantics."""
    n = len(enc_Ws)
    act = v
    p_v = v
    for i in range(n):
        act = p_v @ enc_Ws[i] + h_biases[i]
        p_v = jax.nn.sigmoid(act)
    p_h = act
    for j in range(n):
        W = enc_Ws[n - 1 - j]
        b = v_biases[n - 1 - j]
        p_h = jax.nn.sigmoid(p_h @ W.T + b)
    return p_h


if __name__ == "__main__":
    # Deterministic synthetic "RBM stack": dims D0 -> D1 -> D2
    key = jax.random.PRNGKey(0)
    dims = [128, 256, 64]
    n_layers = len(dims) - 1

    keys = jax.random.split(key, 2 + 3 * n_layers)
    v_small = jax.random.normal(keys[0], (8, dims[0]), dtype=jnp.float32)
    # Larger batch: exercises TB=256, multiple grid steps, and the padless
    # boundary tile (272 = 256 + 16 real rows in the last tile).
    v_big = jax.random.normal(keys[1], (272, dims[0]), dtype=jnp.float32)

    enc_Ws, h_biases, v_biases = [], [], []
    for i in range(n_layers):
        kw, kh, kv = keys[2 + 3 * i], keys[3 + 3 * i], keys[4 + 3 * i]
        enc_Ws.append(
            0.1 * jax.random.normal(kw, (dims[i], dims[i + 1]), dtype=jnp.float32))
        h_biases.append(
            0.1 * jax.random.normal(kh, (dims[i + 1],), dtype=jnp.float32))
        v_biases.append(
            0.1 * jax.random.normal(kv, (dims[i],), dtype=jnp.float32))

    # 1) f32-MXU mode, small batch: tight numerical check.
    ref_small = jax.block_until_ready(dae_reference(v_small, enc_Ws, h_biases, v_biases))
    out_f32 = jax.block_until_ready(
        dae_forward(v_small, enc_Ws, h_biases, v_biases, mxu_dtype=jnp.float32))
    assert out_f32.shape == (8, dims[0]), out_f32.shape
    err = float(jnp.max(jnp.abs(out_f32 - ref_small)))
    assert err < 1e-4, err

    # 2) bf16-MXU mode (optimized path), small batch: relaxed tolerance.
    out_bf16 = jax.block_until_ready(
        dae_forward(v_small, enc_Ws, h_biases, v_biases, mxu_dtype=jnp.bfloat16))
    assert out_bf16.shape == (8, dims[0]), out_bf16.shape
    err = float(jnp.max(jnp.abs(out_bf16 - ref_small)))
    assert err < 5e-2, err

    # 3) f32-MXU mode, larger batch: validates multi-tile grid + boundary-tile
    #    row discard (no host-side batch padding).
    ref_big = jax.block_until_ready(dae_reference(v_big, enc_Ws, h_biases, v_biases))
    out_big = jax.block_until_ready(
        dae_forward(v_big, enc_Ws, h_biases, v_biases, mxu_dtype=jnp.float32))
    assert out_big.shape == (272, dims[0]), out_big.shape
    err = float(jnp.max(jnp.abs(out_big - ref_big)))
    assert err < 1e-4, err

    print("KERNEL_OK")
</pallas_src>

<mosaic_0001>
module attributes {stable_mosaic.version = 11 : i64} {
  func.func @kernel(%arg0: i32, %arg1: memref<8x128xf32, #tpu.memory_space<vmem>>, %arg2: memref<128x256xf32, #tpu.memory_space<vmem>>, %arg3: memref<256x128xf32, #tpu.memory_space<vmem>>, %arg4: memref<1x768xf32, #tpu.memory_space<vmem>>, %arg5: memref<8x128xf32, #tpu.memory_space<vmem>>) attributes {dimension_semantics = [#tpu.dimension_semantics<parallel>], iteration_bounds = array<i64: 1>, scalar_prefetch = 0 : i64, scratch_operands = 0 : i64, tpu.core_type = #tpu.core_type<tc>, window_params = [{transform_indices = @transform_0, window_bounds = array<i64: 8, 128>}, {pipeline_mode = #tpu.pipeline_mode<synchronous>, transform_indices = @transform_1, window_bounds = array<i64: 128, 256>}, {pipeline_mode = #tpu.pipeline_mode<synchronous>, transform_indices = @transform_2, window_bounds = array<i64: 256, 128>}, {pipeline_mode = #tpu.pipeline_mode<synchronous>, transform_indices = @transform_3, window_bounds = array<i64: 1, 768>}, {transform_indices = @transform_4, window_bounds = array<i64: 8, 128>}]} {
    %c0 = arith.constant 0 : index
    %c0_0 = arith.constant 0 : index
    %0 = vector.load %arg1[%c0, %c0_0] : memref<8x128xf32, #tpu.memory_space<vmem>>, vector<8x128xf32>
    %c0_1 = arith.constant 0 : index
    %c0_2 = arith.constant 0 : index
    %1 = vector.load %arg2[%c0_1, %c0_2] : memref<128x256xf32, #tpu.memory_space<vmem>>, vector<128x256xf32>
    %cst = arith.constant dense<0.000000e+00> : vector<8x256xf32>
    %2 = tpu.matmul %0, %1, %cst {dimension_numbers = #tpu.dot_dimension_numbers<[1], [0], [0], [1], [0, 0, 1, 1], [], []>} : vector<8x128xf32>, vector<128x256xf32>, vector<8x256xf32> -> vector<8x256xf32>
    %c0_3 = arith.constant 0 : index
    %c0_4 = arith.constant 0 : index
    %3 = vector.load %arg4[%c0_3, %c0_4] : memref<1x768xf32, #tpu.memory_space<vmem>>, vector<1x256xf32>
    %4 = vector.broadcast %3 : vector<1x256xf32> to vector<8x256xf32>
    %5 = arith.addf %2, %4 : vector<8x256xf32>
    %cst_5 = arith.constant 5.000000e-01 : f32
    %6 = vector.broadcast %cst_5 : f32 to vector<8x256xf32>
    %7 = arith.mulf %6, %5 : vector<8x256xf32>
    %8 = math.tanh %7 : vector<8x256xf32>
    %cst_6 = arith.constant 5.000000e-01 : f32
    %9 = vector.broadcast %cst_6 : f32 to vector<8x256xf32>
    %10 = arith.mulf %9, %8 : vector<8x256xf32>
    %cst_7 = arith.constant 5.000000e-01 : f32
    %11 = vector.broadcast %cst_7 : f32 to vector<8x256xf32>
    %12 = arith.addf %10, %11 : vector<8x256xf32>
    %c0_8 = arith.constant 0 : index
    %c0_9 = arith.constant 0 : index
    %13 = vector.load %arg3[%c0_8, %c0_9] : memref<256x128xf32, #tpu.memory_space<vmem>>, vector<256x128xf32>
    %cst_10 = arith.constant dense<0.000000e+00> : vector<8x128xf32>
    %14 = tpu.matmul %12, %13, %cst_10 {dimension_numbers = #tpu.dot_dimension_numbers<[1], [0], [0], [1], [0, 0, 1, 1], [], []>} : vector<8x256xf32>, vector<256x128xf32>, vector<8x128xf32> -> vector<8x128xf32>
    %c0_11 = arith.constant 0 : index
    %c256 = arith.constant 256 : index
    %15 = vector.load %arg4[%c0_11, %c256] : memref<1x768xf32, #tpu.memory_space<vmem>>, vector<1x128xf32>
    %16 = vector.broadcast %15 : vector<1x128xf32> to vector<8x128xf32>
    %17 = arith.addf %14, %16 : vector<8x128xf32>
    %c0_12 = arith.constant 0 : index
    %c0_13 = arith.constant 0 : index
    %18 = vector.load %arg3[%c0_12, %c0_13] : memref<256x128xf32, #tpu.memory_space<vmem>>, vector<256x128xf32>
    %cst_14 = arith.constant dense<0.000000e+00> : vector<8x256xf32>
    %19 = tpu.matmul %17, %18, %cst_14 {dimension_numbers = #tpu.dot_dimension_numbers<[1], [1], [0], [0], [0, 0, 1, 0], [], []>} : vector<8x128xf32>, vector<256x128xf32>, vector<8x256xf32> -> vector<8x256xf32>
    %c0_15 = arith.constant 0 : index
    %c384 = arith.constant 384 : index
    %20 = vector.load %arg4[%c0_15, %c384] : memref<1x768xf32, #tpu.memory_space<vmem>>, vector<1x256xf32>
    %21 = vector.broadcast %20 : vector<1x256xf32> to vector<8x256xf32>
    %22 = arith.addf %19, %21 : vector<8x256xf32>
    %cst_16 = arith.constant 5.000000e-01 : f32
    %23 = vector.broadcast %cst_16 : f32 to vector<8x256xf32>
    %24 = arith.mulf %23, %22 : vector<8x256xf32>
    %25 = math.tanh %24 : vector<8x256xf32>
    %cst_17 = arith.constant 5.000000e-01 : f32
    %26 = vector.broadcast %cst_17 : f32 to vector<8x256xf32>
    %27 = arith.mulf %26, %25 : vector<8x256xf32>
    %cst_18 = arith.constant 5.000000e-01 : f32
    %28 = vector.broadcast %cst_18 : f32 to vector<8x256xf32>
    %29 = arith.addf %27, %28 : vector<8x256xf32>
    %c0_19 = arith.constant 0 : index
    %c0_20 = arith.constant 0 : index
    %30 = vector.load %arg2[%c0_19, %c0_20] : memref<128x256xf32, #tpu.memory_space<vmem>>, vector<128x256xf32>
    %cst_21 = arith.constant dense<0.000000e+00> : vector<8x128xf32>
    %31 = tpu.matmul %29, %30, %cst_21 {dimension_numbers = #tpu.dot_dimension_numbers<[1], [1], [0], [0], [0, 0, 1, 0], [], []>} : vector<8x256xf32>, vector<128x256xf32>, vector<8x128xf32> -> vector<8x128xf32>
    %c0_22 = arith.constant 0 : index
    %c640 = arith.constant 640 : index
    %32 = vector.load %arg4[%c0_22, %c640] : memref<1x768xf32, #tpu.memory_space<vmem>>, vector<1x128xf32>
    %33 = vector.broadcast %32 : vector<1x128xf32> to vector<8x128xf32>
    %34 = arith.addf %31, %33 : vector<8x128xf32>
    %cst_23 = arith.constant 5.000000e-01 : f32
    %35 = vector.broadcast %cst_23 : f32 to vector<8x128xf32>
    %36 = arith.mulf %35, %34 : vector<8x128xf32>
    %37 = math.tanh %36 : vector<8x128xf32>
    %cst_24 = arith.constant 5.000000e-01 : f32
    %38 = vector.broadcast %cst_24 : f32 to vector<8x128xf32>
    %39 = arith.mulf %38, %37 : vector<8x128xf32>
    %cst_25 = arith.constant 5.000000e-01 : f32
    %40 = vector.broadcast %cst_25 : f32 to vector<8x128xf32>
    %41 = arith.addf %39, %40 : vector<8x128xf32>
    %c0_26 = arith.constant 0 : index
    %c0_27 = arith.constant 0 : index
    %42 = vector.load %arg5[%c0_26, %c0_27] : memref<8x128xf32, #tpu.memory_space<vmem>>, vector<8x128xf32>
    tpu.vector_store %arg5[%c0_26, %c0_27], %41 {strides = array<i32>} : memref<8x128xf32, #tpu.memory_space<vmem>>, vector<8x128xf32>,
    return
  }
  func.func @transform_0(%arg0: i32) -> (i32, i32) {
    %c0_i32 = arith.constant 0 : i32
    %c0_i32_0 = arith.constant 0 : i32
    return %arg0, %c0_i32 : i32, i32
  }
  func.func @transform_1(%arg0: i32) -> (i32, i32) {
    %c0_i32 = arith.constant 0 : i32
    %c0_i32_0 = arith.constant 0 : i32
    %c0_i32_1 = arith.constant 0 : i32
    return %c0_i32, %c0_i32_0 : i32, i32
  }
  func.func @transform_2(%arg0: i32) -> (i32, i32) {
    %c0_i32 = arith.constant 0 : i32
    %c0_i32_0 = arith.constant 0 : i32
    %c0_i32_1 = arith.constant 0 : i32
    return %c0_i32, %c0_i32_0 : i32, i32
  }
  func.func @transform_3(%arg0: i32) -> (i32, i32) {
    %c0_i32 = arith.constant 0 : i32
    %c0_i32_0 = arith.constant 0 : i32
    %c0_i32_1 = arith.constant 0 : i32
    return %c0_i32, %c0_i32_0 : i32, i32
  }
  func.func @transform_4(%arg0: i32) -> (i32, i32) {
    %c0_i32 = arith.constant 0 : i32
    %c0_i32_0 = arith.constant 0 : i32
    return %arg0, %c0_i32 : i32, i32
  }
}

module attributes {stable_mosaic.version = 11 : i64} {
  func.func @kernel(%arg0: i32, %arg1: memref<8x128xf32, #tpu.memory_space<vmem>>, %arg2: memref<128x256xf32, #tpu.memory_space<vmem>>, %arg3: memref<256x128xf32, #tpu.memory_space<vmem>>, %arg4: memref<1x768xf32, #tpu.memory_space<vmem>>, %arg5: memref<8x128xf32, #tpu.memory_space<vmem>>) attributes {dimension_semantics = [#tpu.dimension_semantics<parallel>], iteration_bounds = array<i64: 1>, scalar_prefetch = 0 : i64, scratch_operands = 0 : i64, tpu.core_type = #tpu.core_type<tc>, window_params = [{transform_indices = @transform_0, window_bounds = array<i64: 8, 128>}, {pipeline_mode = #tpu.pipeline_mode<synchronous>, transform_indices = @transform_1, window_bounds = array<i64: 128, 256>}, {pipeline_mode = #tpu.pipeline_mode<synchronous>, transform_indices = @transform_2, window_bounds = array<i64: 256, 128>}, {pipeline_mode = #tpu.pipeline_mode<synchronous>, transform_indices = @transform_3, window_bounds = array<i64: 1, 768>}, {transform_indices = @transform_4, window_bounds = array<i64: 8, 128>}]} {
    %c0 = arith.constant 0 : index
    %c0_0 = arith.constant 0 : index
    %0 = vector.load %arg1[%c0, %c0_0] : memref<8x128xf32, #tpu.memory_space<vmem>>, vector<8x128xf32>
    %c0_1 = arith.constant 0 : index
    %c0_2 = arith.constant 0 : index
    %1 = vector.load %arg2[%c0_1, %c0_2] : memref<128x256xf32, #tpu.memory_space<vmem>>, vector<128x256xf32>
    %cst = arith.constant dense<0.000000e+00> : vector<8x256xf32>
    %2 = tpu.matmul %0, %1, %cst {dimension_numbers = #tpu.dot_dimension_numbers<[1], [0], [0], [1], [0, 0, 1, 1], [], []>} : vector<8x128xf32>, vector<128x256xf32>, vector<8x256xf32> -> vector<8x256xf32>
    %c0_3 = arith.constant 0 : index
    %c0_4 = arith.constant 0 : index
    %3 = vector.load %arg4[%c0_3, %c0_4] : memref<1x768xf32, #tpu.memory_space<vmem>>, vector<1x256xf32>
    %4 = vector.broadcast %3 : vector<1x256xf32> to vector<8x256xf32>
    %5 = arith.addf %2, %4 : vector<8x256xf32>
    %cst_5 = arith.constant 5.000000e-01 : f32
    %6 = vector.broadcast %cst_5 : f32 to vector<8x256xf32>
    %7 = arith.mulf %6, %5 : vector<8x256xf32>
    %8 = math.tanh %7 : vector<8x256xf32>
    %cst_6 = arith.constant 5.000000e-01 : f32
    %9 = vector.broadcast %cst_6 : f32 to vector<8x256xf32>
    %10 = arith.mulf %9, %8 : vector<8x256xf32>
    %cst_7 = arith.constant 5.000000e-01 : f32
    %11 = vector.broadcast %cst_7 : f32 to vector<8x256xf32>
    %12 = arith.addf %10, %11 : vector<8x256xf32>
    %c0_8 = arith.constant 0 : index
    %c0_9 = arith.constant 0 : index
    %13 = vector.load %arg3[%c0_8, %c0_9] : memref<256x128xf32, #tpu.memory_space<vmem>>, vector<256x128xf32>
    %cst_10 = arith.constant dense<0.000000e+00> : vector<8x128xf32>
    %14 = tpu.matmul %12, %13, %cst_10 {dimension_numbers = #tpu.dot_dimension_numbers<[1], [0], [0], [1], [0, 0, 1, 1], [], []>} : vector<8x256xf32>, vector<256x128xf32>, vector<8x128xf32> -> vector<8x128xf32>
    %c0_11 = arith.constant 0 : index
    %c256 = arith.constant 256 : index
    %15 = vector.load %arg4[%c0_11, %c256] : memref<1x768xf32, #tpu.memory_space<vmem>>, vector<1x128xf32>
    %16 = vector.broadcast %15 : vector<1x128xf32> to vector<8x128xf32>
    %17 = arith.addf %14, %16 : vector<8x128xf32>
    %c0_12 = arith.constant 0 : index
    %c0_13 = arith.constant 0 : index
    %18 = vector.load %arg3[%c0_12, %c0_13] : memref<256x128xf32, #tpu.memory_space<vmem>>, vector<256x128xf32>
    %cst_14 = arith.constant dense<0.000000e+00> : vector<8x256xf32>
    %19 = tpu.matmul %17, %18, %cst_14 {dimension_numbers = #tpu.dot_dimension_numbers<[1], [1], [0], [0], [0, 0, 1, 0], [], []>} : vector<8x128xf32>, vector<256x128xf32>, vector<8x256xf32> -> vector<8x256xf32>
    %c0_15 = arith.constant 0 : index
    %c384 = arith.constant 384 : index
    %20 = vector.load %arg4[%c0_15, %c384] : memref<1x768xf32, #tpu.memory_space<vmem>>, vector<1x256xf32>
    %21 = vector.broadcast %20 : vector<1x256xf32> to vector<8x256xf32>
    %22 = arith.addf %19, %21 : vector<8x256xf32>
    %cst_16 = arith.constant 5.000000e-01 : f32
    %23 = vector.broadcast %cst_16 : f32 to vector<8x256xf32>
    %24 = arith.mulf %23, %22 : vector<8x256xf32>
    %25 = math.tanh %24 : vector<8x256xf32>
    %cst_17 = arith.constant 5.000000e-01 : f32
    %26 = vector.broadcast %cst_17 : f32 to vector<8x256xf32>
    %27 = arith.mulf %26, %25 : vector<8x256xf32>
    %cst_18 = arith.constant 5.000000e-01 : f32
    %28 = vector.broadcast %cst_18 : f32 to vector<8x256xf32>
    %29 = arith.addf %27, %28 : vector<8x256xf32>
    %c0_19 = arith.constant 0 : index
    %c0_20 = arith.constant 0 : index
    %30 = vector.load %arg2[%c0_19, %c0_20] : memref<128x256xf32, #tpu.memory_space<vmem>>, vector<128x256xf32>
    %cst_21 = arith.constant dense<0.000000e+00> : vector<8x128xf32>
    %31 = tpu.matmul %29, %30, %cst_21 {dimension_numbers = #tpu.dot_dimension_numbers<[1], [1], [0], [0], [0, 0, 1, 0], [], []>} : vector<8x256xf32>, vector<128x256xf32>, vector<8x128xf32> -> vector<8x128xf32>
    %c0_22 = arith.constant 0 : index
    %c640 = arith.constant 640 : index
    %32 = vector.load %arg4[%c0_22, %c640] : memref<1x768xf32, #tpu.memory_space<vmem>>, vector<1x128xf32>
    %33 = vector.broadcast %32 : vector<1x128xf32> to vector<8x128xf32>
    %34 = arith.addf %31, %33 : vector<8x128xf32>
    %cst_23 = arith.constant 5.000000e-01 : f32
    %35 = vector.broadcast %cst_23 : f32 to vector<8x128xf32>
    %36 = arith.mulf %35, %34 : vector<8x128xf32>
    %37 = math.tanh %36 : vector<8x128xf32>
    %cst_24 = arith.constant 5.000000e-01 : f32
    %38 = vector.broadcast %cst_24 : f32 to vector<8x128xf32>
    %39 = arith.mulf %38, %37 : vector<8x128xf32>
    %cst_25 = arith.constant 5.000000e-01 : f32
    %40 = vector.broadcast %cst_25 : f32 to vector<8x128xf32>
    %41 = arith.addf %39, %40 : vector<8x128xf32>
    %c0_26 = arith.constant 0 : index
    %c0_27 = arith.constant 0 : index
    %42 = vector.load %arg5[%c0_26, %c0_27] : memref<8x128xf32, #tpu.memory_space<vmem>>, vector<8x128xf32>
    tpu.vector_store %arg5[%c0_26, %c0_27], %41 {strides = array<i32>} : memref<8x128xf32, #tpu.memory_space<vmem>>, vector<8x128xf32>,
    return
  }
  func.func @transform_0(%arg0: i32) -> (i32, i32) {
    %c0_i32 = arith.constant 0 : i32
    %c0_i32_0 = arith.constant 0 : i32
    return %arg0, %c0_i32 : i32, i32
  }
  func.func @transform_1(%arg0: i32) -> (i32, i32) {
    %c0_i32 = arith.constant 0 : i32
    %c0_i32_0 = arith.constant 0 : i32
    %c0_i32_1 = arith.constant 0 : i32
    return %c0_i32, %c0_i32_0 : i32, i32
  }
  func.func @transform_2(%arg0: i32) -> (i32, i32) {
    %c0_i32 = arith.constant 0 : i32
    %c0_i32_0 = arith.constant 0 : i32
    %c0_i32_1 = arith.constant 0 : i32
    return %c0_i32, %c0_i32_0 : i32, i32
  }
  func.func @transform_3(%arg0: i32) -> (i32, i32) {
    %c0_i32 = arith.constant 0 : i32
    %c0_i32_0 = arith.constant 0 : i32
    %c0_i32_1 = arith.constant 0 : i32
    return %c0_i32, %c0_i32_0 : i32, i32
  }
  func.func @transform_4(%arg0: i32) -> (i32, i32) {
    %c0_i32 = arith.constant 0 : i32
    %c0_i32_0 = arith.constant 0 : i32
    return %arg0, %c0_i32 : i32, i32
  }
}

</mosaic_0001>

<llo_original>
// kernel: tpu_custom_call.1
$region0: #{tpu_custom_call.1}
  #allocation0 [shape = 'u32[]', space=smem, size = 0x4, offset = 0x4, fixed_abs, tag = 'smem constant byte address 0x4 - core index']
  #allocation1 [shape = 'u32[144,128]{1,0:T(1,128)}', space=vmem, size = 0x12000, scoped, tag = 'internal scratch']
  %s0 = inlined_call_operand.hbm [shape: f32[8,128], index: 0, kind: input, shape index: {}]
  %s1 = inlined_call_operand.hbm [shape: f32[128,256], index: 1, kind: input, shape index: {}]
  %s2 = inlined_call_operand.hbm [shape: f32[256,128], index: 2, kind: input, shape index: {}]
  %s3 = inlined_call_operand.hbm [shape: f32[1,768], index: 3, kind: input, shape index: {}]
  %s4 = inlined_call_operand.hbm [shape: f32[8,128], index: 4, kind: output, shape index: {}]
  %s5 = sld [smem:[#allocation0]]
  $region42: #{tpu_custom_call.1} parent=0
    _
  %s7 = ssub.s32 1, %s5
  %s8 = scalar_select 0, %s7, %s5
  $region1: #{tpu_custom_call.1} parent=0
    #allocation2 [shape = 'u8[4096]{0}', space=vmem, size = 0x1000, scoped, tag = 'input window, operand 0, single buffered']
    #allocation3 [shape = 's32[1]{0}', space=sflag, size = 0x4, scoped, tag = 'scoped memory for tpu_custom_call.1']
    #allocation4 [shape = 's32[1]{0}', space=sflag, size = 0x4, scoped, tag = 'scoped memory for tpu_custom_call.1']
    #allocation5 [shape = 'u8[131072]{0}', space=vmem, size = 0x20000, scoped, tag = 'input window, operand 1, single buffered']
    #allocation6 [shape = 's32[1]{0}', space=sflag, size = 0x4, scoped, tag = 'scoped memory for tpu_custom_call.1']
    #allocation7 [shape = 'u8[131072]{0}', space=vmem, size = 0x20000, scoped, tag = 'input window, operand 2, single buffered']
    #allocation8 [shape = 'u8[3072]{0}', space=vmem, size = 0xc00, scoped, tag = 'input window, operand 3, single buffered']
    #allocation9 [shape = 's32[1]{0}', space=sflag, size = 0x4, scoped, tag = 'scoped memory for tpu_custom_call.1']
    #allocation10 [shape = 'u8[4096]{0}', space=vmem, size = 0x1000, scoped, tag = 'output window, operand 0, single buffered']
    %9 = vsyncpa [#allocation3], 0
    %10 = vsyncpa [#allocation6], 0
    %11 = vsyncpa [#allocation9], 0
    %12 = vsyncpa [#allocation4], 0
    // Predicated region
    $region2: #{tpu_custom_call.1} parent=1 // pred_check
      _
    $region3: #{tpu_custom_call.1} parent=1 // pred_check_branch
      %14 = sbr.rel (0) target = $region5
    $region4: #{tpu_custom_call.1} parent=1 // pred_region
      %s16 = ssub.s32 128, 128
      %17 = vsyncadd [#allocation3], %s16
      %s19 = sshll.u32 [#allocation2], 4
      %s20 = int_to_ptr.vmem [resolvable:$true] %s19
      %22 = dma.hbm_to_vmem [thread:$0]  %s0, 128, %s20, [#allocation3]
    $region5: #{tpu_custom_call.1} parent=1 // pred_fallthru
      _
    // Predicated region
    $region6: #{tpu_custom_call.1} parent=1 // pred_check
      _
    $region7: #{tpu_custom_call.1} parent=1 // pred_check_branch
      %24 = sbr.rel (0) target = $region9
    $region8: #{tpu_custom_call.1} parent=1 // pred_region
      %s26 = ssub.s32 4096, 4096
      %27 = vsyncadd [#allocation6], %s26
      %s28 = sshll.u32 [#allocation5], 4
      %s29 = int_to_ptr.vmem [resolvable:$true] %s28
      %34 = dma.hbm_to_vmem [thread:$0]  %s1, 4096, %s29, [#allocation6], 256, 256, 16
    $region9: #{tpu_custom_call.1} parent=1 // pred_fallthru
      _
    // Predicated region
    $region10: #{tpu_custom_call.1} parent=1 // pred_check
      _
    $region11: #{tpu_custom_call.1} parent=1 // pred_check_branch
      %36 = sbr.rel (0) target = $region13
    $region12: #{tpu_custom_call.1} parent=1 // pred_region
      %s38 = ssub.s32 4096, 4096
      %39 = vsyncadd [#allocation6], %s38
      %s40 = sshll.u32 [#allocation7], 4
      %s41 = int_to_ptr.vmem [resolvable:$true] %s40
      %46 = dma.hbm_to_vmem [thread:$0]  %s2, 4096, %s41, [#allocation6], 128, 128, 8
    $region13: #{tpu_custom_call.1} parent=1 // pred_fallthru
      _
    // Predicated region
    $region14: #{tpu_custom_call.1} parent=1 // pred_check
      _
    $region15: #{tpu_custom_call.1} parent=1 // pred_check_branch
      %48 = sbr.rel (0) target = $region17
    $region16: #{tpu_custom_call.1} parent=1 // pred_region
      %s50 = ssub.s32 96, 96
      %51 = vsyncadd [#allocation9], %s50
      %s53 = sshll.u32 [#allocation8], 4
      %s54 = int_to_ptr.vmem [resolvable:$true] %s53
      %56 = dma.hbm_to_vmem [thread:$0]  %s3, 96, %s54, [#allocation9]
    $region17: #{tpu_custom_call.1} parent=1 // pred_fallthru
      _
    // Predicated region
    $region18: #{tpu_custom_call.1} parent=1 // pred_check
      _
    $region19: #{tpu_custom_call.1} parent=1 // pred_check_branch
      %58 = sbr.rel (0) target = $region21
    $region20: #{tpu_custom_call.1} parent=1 // pred_region
      %59 = dma.done [#allocation3], 128
    $region21: #{tpu_custom_call.1} parent=1 // pred_fallthru
      _
    // Predicated region
    $region22: #{tpu_custom_call.1} parent=1 // pred_check
      _
    $region23: #{tpu_custom_call.1} parent=1 // pred_check_branch
      %61 = sbr.rel (0) target = $region25
    $region24: #{tpu_custom_call.1} parent=1 // pred_region
      %62 = dma.done [#allocation6], 4096
    $region25: #{tpu_custom_call.1} parent=1 // pred_fallthru
      _
    // Predicated region
    $region26: #{tpu_custom_call.1} parent=1 // pred_check
      _
    $region27: #{tpu_custom_call.1} parent=1 // pred_check_branch
      %64 = sbr.rel (0) target = $region29
    $region28: #{tpu_custom_call.1} parent=1 // pred_region
      %65 = dma.done [#allocation6], 4096
    $region29: #{tpu_custom_call.1} parent=1 // pred_fallthru
      _
    // Predicated region
    $region30: #{tpu_custom_call.1} parent=1 // pred_check
      _
    $region31: #{tpu_custom_call.1} parent=1 // pred_check_branch
      %67 = sbr.rel (0) target = $region33
    $region32: #{tpu_custom_call.1} parent=1 // pred_region
      %68 = dma.done [#allocation9], 96
    $region33: #{tpu_custom_call.1} parent=1 // pred_fallthru
      _
    %v69 = vld [vmem:[#allocation2] sm:$0xff]
    %v70 = vld [vmem:[#allocation5] sm:$0xff]
    %v71 = vld [vmem:[#allocation5 + $0x8] sm:$0xff]
    %v72 = vld [vmem:[#allocation5 + $0x10] sm:$0xff]
    %v73 = vld [vmem:[#allocation5 + $0x18] sm:$0xff]
    %v74 = vld [vmem:[#allocation5 + $0x20] sm:$0xff]
    %v75 = vld [vmem:[#allocation5 + $0x28] sm:$0xff]
    %v76 = vld [vmem:[#allocation5 + $0x30] sm:$0xff]
    %v77 = vld [vmem:[#allocation5 + $0x38] sm:$0xff]
    %v78 = vld [vmem:[#allocation5 + $0x40] sm:$0xff]
    %v79 = vld [vmem:[#allocation5 + $0x48] sm:$0xff]
    %v80 = vld [vmem:[#allocation5 + $0x50] sm:$0xff]
    %v81 = vld [vmem:[#allocation5 + $0x58] sm:$0xff]
    %v82 = vld [vmem:[#allocation5 + $0x60] sm:$0xff]
    %v83 = vld [vmem:[#allocation5 + $0x68] sm:$0xff]
    %v84 = vld [vmem:[#allocation5 + $0x70] sm:$0xff]
    %v85 = vld [vmem:[#allocation5 + $0x78] sm:$0xff]
    %v86 = vld [vmem:[#allocation5 + $0x80] sm:$0xff]
    %v87 = vld [vmem:[#allocation5 + $0x88] sm:$0xff]
    %v88 = vld [vmem:[#allocation5 + $0x90] sm:$0xff]
    %v89 = vld [vmem:[#allocation5 + $0x98] sm:$0xff]
    %v90 = vld [vmem:[#allocation5 + $0xa0] sm:$0xff]
    %v91 = vld [vmem:[#allocation5 + $0xa8] sm:$0xff]
    %v92 = vld [vmem:[#allocation5 + $0xb0] sm:$0xff]
    %v93 = vld [vmem:[#allocation5 + $0xb8] sm:$0xff]
    %v94 = vld [vmem:[#allocation5 + $0xc0] sm:$0xff]
    %v95 = vld [vmem:[#allocation5 + $0xc8] sm:$0xff]
    %v96 = vld [vmem:[#allocation5 + $0xd0] sm:$0xff]
    %v97 = vld [vmem:[#allocation5 + $0xd8] sm:$0xff]
    %v98 = vld [vmem:[#allocation5 + $0xe0] sm:$0xff]
    %v99 = vld [vmem:[#allocation5 + $0xe8] sm:$0xff]
    %v100 = vld [vmem:[#allocation5 + $0xf0] sm:$0xff]
    %v101 = vld [vmem:[#allocation5 + $0xf8] sm:$0xff]
    %v102 = vld [vmem:[#allocation8] sm:$0x3]
    %v104 = vlaneseq
    %v105 = vshrl.u32 %v104, 7
    %v106 = vsub.s32 0, %v105
    %v107 = vrot.slane %v102, %v106
    %v108 = vlaneseq
    %v109 = vshrl.u32 %v108, 7
    %v110 = vsub.s32 1, %v109
    %v111 = vrot.slane %v102, %v110
    %114 = vmatprep.subr.mxu0 %v71
    %115 = vmatpush1.msra.mxu0 %v70
    %116 = vmatprep.subr.mxu0 %v73
    %117 = vmatpush1.msra.mxu0 %v72
    %118 = vmatprep.subr.mxu0 %v75
    %119 = vmatpush1.msra.mxu0 %v74
    %120 = vmatprep.subr.mxu0 %v77
    %121 = vmatpush1.msra.mxu0 %v76
    %122 = vmatprep.subr.mxu0 %v79
    %123 = vmatpush1.msra.mxu0 %v78
    %124 = vmatprep.subr.mxu0 %v81
    %125 = vmatpush1.msra.mxu0 %v80
    %126 = vmatprep.subr.mxu0 %v83
    %127 = vmatpush1.msra.mxu0 %v82
    %128 = vmatprep.subr.mxu0 %v85
    %129 = vmatpush1.msra.mxu0 %v84
    %130 = vmatprep.subr.mxu0 %v87
    %131 = vmatpush1.msra.mxu0 %v86
    %132 = vmatprep.subr.mxu0 %v89
    %133 = vmatpush1.msra.mxu0 %v88
    %134 = vmatprep.subr.mxu0 %v91
    %135 = vmatpush1.msra.mxu0 %v90
    %136 = vmatprep.subr.mxu0 %v93
    %137 = vmatpush1.msra.mxu0 %v92
    %138 = vmatprep.subr.mxu0 %v95
    %139 = vmatpush1.msra.mxu0 %v94
    %140 = vmatprep.subr.mxu0 %v97
    %141 = vmatpush1.msra.mxu0 %v96
    %142 = vmatprep.subr.mxu0 %v99
    %143 = vmatpush1.msra.mxu0 %v98
    %144 = vmatprep.subr.mxu0 %v101
    %145 = vmatpush1.msra.mxu0 %v100
    %146 = vmatprep.subr.mxu0 0.0
    %147 = vmatpush1.msra.mxu0 0.0
    %148 = vmatprep.subr.mxu0 0.0
    %149 = vmatpush1.msra.mxu0 0.0
    %150 = vmatprep.subr.mxu0 0.0
    %151 = vmatpush1.msra.mxu0 0.0
    %152 = vmatprep.subr.mxu0 0.0
    %153 = vmatpush1.msra.mxu0 0.0
    %154 = vmatprep.subr.mxu0 0.0
    %155 = vmatpush1.msra.mxu0 0.0
    %156 = vmatprep.subr.mxu0 0.0
    %157 = vmatpush1.msra.mxu0 0.0
    %158 = vmatprep.subr.mxu0 0.0
    %159 = vmatpush1.msra.mxu0 0.0
    %160 = vmatprep.subr.mxu0 0.0
    %161 = vmatpush1.msra.mxu0 0.0
    %162 = vmatprep.subr.mxu0 0.0
    %163 = vmatpush1.msra.mxu0 0.0
    %164 = vmatprep.subr.mxu0 0.0
    %165 = vmatpush1.msra.mxu0 0.0
    %166 = vmatprep.subr.mxu0 0.0
    %167 = vmatpush1.msra.mxu0 0.0
    %168 = vmatprep.subr.mxu0 0.0
    %169 = vmatpush1.msra.mxu0 0.0
    %170 = vmatprep.subr.mxu0 0.0
    %171 = vmatpush1.msra.mxu0 0.0
    %172 = vmatprep.subr.mxu0 0.0
    %173 = vmatpush1.msra.mxu0 0.0
    %174 = vmatprep.subr.mxu0 0.0
    %175 = vmatpush1.msra.mxu0 0.0
    %176 = vmatprep.subr.mxu0 0.0
    %177 = vmatpush1.msra.mxu0 0.0
    %178 = vmatprep.mubr.f32.mxu0 0.0
    %179 = vmatmul.mubr.f32.gmra.mrb[0].mxu0 %v69
    %v180 = vpop.f32.mrb[0].mxu0
    %v181 = vadd.f32 %v107, %v180
    %v182 = vpop.f32.mrb[0].mxu0
    %v183 = vadd.f32 %v111, %v182
    %184 = vdwg.mxu0
    %v185 = vmul.f32 %v181, 0.5
    %v186 = vmul.f32 %v183, 0.5
    %v187 = vtanh.pop %v185
    %v188 = vtanh.pop %v186
    %v189 = vmul.f32 %v187, 0.5
    %v190 = vmul.f32 %v188, 0.5
    %v191 = vadd.f32 %v189, 0.5
    %v192 = vadd.f32 %v190, 0.5
    %v193 = vld [vmem:[#allocation7] sm:$0xff]
    %v194 = vld [vmem:[#allocation7 + $0x8] sm:$0xff]
    %v195 = vld [vmem:[#allocation7 + $0x10] sm:$0xff]
    %v196 = vld [vmem:[#allocation7 + $0x18] sm:$0xff]
    %v197 = vld [vmem:[#allocation7 + $0x20] sm:$0xff]
    %v198 = vld [vmem:[#allocation7 + $0x28] sm:$0xff]
    %v199 = vld [vmem:[#allocation7 + $0x30] sm:$0xff]
    %v200 = vld [vmem:[#allocation7 + $0x38] sm:$0xff]
    %v201 = vld [vmem:[#allocation7 + $0x40] sm:$0xff]
    %v202 = vld [vmem:[#allocation7 + $0x48] sm:$0xff]
    %v203 = vld [vmem:[#allocation7 + $0x50] sm:$0xff]
    %v204 = vld [vmem:[#allocation7 + $0x58] sm:$0xff]
    %v205 = vld [vmem:[#allocation7 + $0x60] sm:$0xff]
    %v206 = vld [vmem:[#allocation7 + $0x68] sm:$0xff]
    %v207 = vld [vmem:[#allocation7 + $0x70] sm:$0xff]
    %v208 = vld [vmem:[#allocation7 + $0x78] sm:$0xff]
    %v209 = vld [vmem:[#allocation7 + $0x80] sm:$0xff]
    %v210 = vld [vmem:[#allocation7 + $0x88] sm:$0xff]
    %v211 = vld [vmem:[#allocation7 + $0x90] sm:$0xff]
    %v212 = vld [vmem:[#allocation7 + $0x98] sm:$0xff]
    %v213 = vld [vmem:[#allocation7 + $0xa0] sm:$0xff]
    %v214 = vld [vmem:[#allocation7 + $0xa8] sm:$0xff]
    %v215 = vld [vmem:[#allocation7 + $0xb0] sm:$0xff]
    %v216 = vld [vmem:[#allocation7 + $0xb8] sm:$0xff]
    %v217 = vld [vmem:[#allocation7 + $0xc0] sm:$0xff]
    %v218 = vld [vmem:[#allocation7 + $0xc8] sm:$0xff]
    %v219 = vld [vmem:[#allocation7 + $0xd0] sm:$0xff]
    %v220 = vld [vmem:[#allocation7 + $0xd8] sm:$0xff]
    %v221 = vld [vmem:[#allocation7 + $0xe0] sm:$0xff]
    %v222 = vld [vmem:[#allocation7 + $0xe8] sm:$0xff]
    %v223 = vld [vmem:[#allocation7 + $0xf0] sm:$0xff]
    %v224 = vld [vmem:[#allocation7 + $0xf8] sm:$0xff]
    %v225 = vld [vmem:[#allocation8 + $0x2] sm:$0x1]
    %v227 = vlaneseq
    %v228 = vshrl.u32 %v227, 7
    %v229 = vsub.s32 0, %v228
    %v230 = vrot.slane %v225, %v229
    %232 = vmatprep.subr.mxu0 0.0
    %233 = vmatpush1.msra.mxu0 %v193
    %234 = vmatprep.subr.mxu0 0.0
    %235 = vmatpush1.msra.mxu0 %v194
    %236 = vmatprep.subr.mxu0 0.0
    %237 = vmatpush1.msra.mxu0 %v195
    %238 = vmatprep.subr.mxu0 0.0
    %239 = vmatpush1.msra.mxu0 %v196
    %240 = vmatprep.subr.mxu0 0.0
    %241 = vmatpush1.msra.mxu0 %v197
    %242 = vmatprep.subr.mxu0 0.0
    %243 = vmatpush1.msra.mxu0 %v198
    %244 = vmatprep.subr.mxu0 0.0
    %245 = vmatpush1.msra.mxu0 %v199
    %246 = vmatprep.subr.mxu0 0.0
    %247 = vmatpush1.msra.mxu0 %v200
    %248 = vmatprep.subr.mxu0 0.0
    %249 = vmatpush1.msra.mxu0 %v201
    %250 = vmatprep.subr.mxu0 0.0
    %251 = vmatpush1.msra.mxu0 %v202
    %252 = vmatprep.subr.mxu0 0.0
    %253 = vmatpush1.msra.mxu0 %v203
    %254 = vmatprep.subr.mxu0 0.0
    %255 = vmatpush1.msra.mxu0 %v204
    %256 = vmatprep.subr.mxu0 0.0
    %257 = vmatpush1.msra.mxu0 %v205
    %258 = vmatprep.subr.mxu0 0.0
    %259 = vmatpush1.msra.mxu0 %v206
    %260 = vmatprep.subr.mxu0 0.0
    %261 = vmatpush1.msra.mxu0 %v207
    %262 = vmatprep.subr.mxu0 0.0
    %263 = vmatpush1.msra.mxu0 %v208
    %264 = vmatprep.subr.mxu0 0.0
    %265 = vmatpush1.msra.mxu0 %v209
    %266 = vmatprep.subr.mxu0 0.0
    %267 = vmatpush1.msra.mxu0 %v210
    %268 = vmatprep.subr.mxu0 0.0
    %269 = vmatpush1.msra.mxu0 %v211
    %270 = vmatprep.subr.mxu0 0.0
    %271 = vmatpush1.msra.mxu0 %v212
    %272 = vmatprep.subr.mxu0 0.0
    %273 = vmatpush1.msra.mxu0 %v213
    %274 = vmatprep.subr.mxu0 0.0
    %275 = vmatpush1.msra.mxu0 %v214
    %276 = vmatprep.subr.mxu0 0.0
    %277 = vmatpush1.msra.mxu0 %v215
    %278 = vmatprep.subr.mxu0 0.0
    %279 = vmatpush1.msra.mxu0 %v216
    %280 = vmatprep.subr.mxu0 0.0
    %281 = vmatpush1.msra.mxu0 %v217
    %282 = vmatprep.subr.mxu0 0.0
    %283 = vmatpush1.msra.mxu0 %v218
    %284 = vmatprep.subr.mxu0 0.0
    %285 = vmatpush1.msra.mxu0 %v219
    %286 = vmatprep.subr.mxu0 0.0
    %287 = vmatpush1.msra.mxu0 %v220
    %288 = vmatprep.subr.mxu0 0.0
    %289 = vmatpush1.msra.mxu0 %v221
    %290 = vmatprep.subr.mxu0 0.0
    %291 = vmatpush1.msra.mxu0 %v222
    %292 = vmatprep.subr.mxu0 0.0
    %293 = vmatpush1.msra.mxu0 %v223
    %294 = vmatprep.subr.mxu0 0.0
    %295 = vmatpush1.msra.mxu0 %v224
    %296 = vmatprep.mubr.f32.mxu0 %v192
    %297 = vmatmul.mubr.f32.gmra.mrb[0].mxu0 %v191
    %v298 = vpop.f32.mrb[0].mxu0
    %v299 = vadd.f32 %v230, %v298
    %v300 = vpop.f32.mrb[0].mxu0
    %301 = vdwg.mxu0
    %v302 = vld [vmem:[#allocation8 + $0x3] sm:$0x3]
    %v304 = vlaneseq
    %v305 = vshrl.u32 %v304, 7
    %v306 = vsub.s32 0, %v305
    %v307 = vrot.slane %v302, %v306
    %v308 = vlaneseq
    %v309 = vshrl.u32 %v308, 7
    %v310 = vsub.s32 1, %v309
    %v311 = vrot.slane %v302, %v310
    %314 = vmatprep.subr.mxu0 0.0
    %315 = vmatpush1.xpose.msra.mxu0 %v193
    %316 = vmatprep.subr.mxu0 0.0
    %317 = vmatpush1.xpose.msra.mxu0 %v194
    %318 = vmatprep.subr.mxu0 0.0
    %319 = vmatpush1.xpose.msra.mxu0 %v195
    %320 = vmatprep.subr.mxu0 0.0
    %321 = vmatpush1.xpose.msra.mxu0 %v196
    %322 = vmatprep.subr.mxu0 0.0
    %323 = vmatpush1.xpose.msra.mxu0 %v197
    %324 = vmatprep.subr.mxu0 0.0
    %325 = vmatpush1.xpose.msra.mxu0 %v198
    %326 = vmatprep.subr.mxu0 0.0
    %327 = vmatpush1.xpose.msra.mxu0 %v199
    %328 = vmatprep.subr.mxu0 0.0
    %329 = vmatpush1.xpose.msra.mxu0 %v200
    %330 = vmatprep.subr.mxu0 0.0
    %331 = vmatpush1.xpose.msra.mxu0 %v201
    %332 = vmatprep.subr.mxu0 0.0
    %333 = vmatpush1.xpose.msra.mxu0 %v202
    %334 = vmatprep.subr.mxu0 0.0
    %335 = vmatpush1.xpose.msra.mxu0 %v203
    %336 = vmatprep.subr.mxu0 0.0
    %337 = vmatpush1.xpose.msra.mxu0 %v204
    %338 = vmatprep.subr.mxu0 0.0
    %339 = vmatpush1.xpose.msra.mxu0 %v205
    %340 = vmatprep.subr.mxu0 0.0
    %341 = vmatpush1.xpose.msra.mxu0 %v206
    %342 = vmatprep.subr.mxu0 0.0
    %343 = vmatpush1.xpose.msra.mxu0 %v207
    %344 = vmatprep.subr.mxu0 0.0
    %345 = vmatpush1.xpose.msra.mxu0 %v208
    %346 = vmatprep.subr.mxu0 0.0
    %347 = vmatpush1.xpose.msra.mxu0 %v209
    %348 = vmatprep.subr.mxu0 0.0
    %349 = vmatpush1.xpose.msra.mxu0 %v210
    %350 = vmatprep.subr.mxu0 0.0
    %351 = vmatpush1.xpose.msra.mxu0 %v211
    %352 = vmatprep.subr.mxu0 0.0
    %353 = vmatpush1.xpose.msra.mxu0 %v212
    %354 = vmatprep.subr.mxu0 0.0
    %355 = vmatpush1.xpose.msra.mxu0 %v213
    %356 = vmatprep.subr.mxu0 0.0
    %357 = vmatpush1.xpose.msra.mxu0 %v214
    %358 = vmatprep.subr.mxu0 0.0
    %359 = vmatpush1.xpose.msra.mxu0 %v215
    %360 = vmatprep.subr.mxu0 0.0
    %361 = vmatpush1.xpose.msra.mxu0 %v216
    %362 = vmatprep.subr.mxu0 0.0
    %363 = vmatpush1.xpose.msra.mxu0 %v217
    %364 = vmatprep.subr.mxu0 0.0
    %365 = vmatpush1.xpose.msra.mxu0 %v218
    %366 = vmatprep.subr.mxu0 0.0
    %367 = vmatpush1.xpose.msra.mxu0 %v219
    %368 = vmatprep.subr.mxu0 0.0
    %369 = vmatpush1.xpose.msra.mxu0 %v220
    %370 = vmatprep.subr.mxu0 0.0
    %371 = vmatpush1.xpose.msra.mxu0 %v221
    %372 = vmatprep.subr.mxu0 0.0
    %373 = vmatpush1.xpose.msra.mxu0 %v222
    %374 = vmatprep.subr.mxu0 0.0
    %375 = vmatpush1.xpose.msra.mxu0 %v223
    %376 = vmatprep.subr.mxu0 0.0
    %377 = vmatpush1.xpose.msra.mxu0 %v224
    %378 = vmatprep.mubr.f32.mxu0 0.0
    %379 = vmatmul.mubr.f32.gmra.mrb[0].mxu0 %v299
    %v380 = vpop.f32.mrb[0].mxu0
    %v381 = vadd.f32 %v307, %v380
    %v382 = vpop.f32.mrb[0].mxu0
    %v383 = vadd.f32 %v311, %v382
    %384 = vdwg.mxu0
    %v385 = vmul.f32 %v381, 0.5
    %v386 = vmul.f32 %v383, 0.5
    %v387 = vtanh.pop %v385
    %v388 = vtanh.pop %v386
    %v389 = vmul.f32 %v387, 0.5
    %v390 = vmul.f32 %v388, 0.5
    %v391 = vadd.f32 %v389, 0.5
    %v392 = vadd.f32 %v390, 0.5
    %v393 = vld [vmem:[#allocation8 + $0x5] sm:$0x1]
    %v395 = vlaneseq
    %v396 = vshrl.u32 %v395, 7
    %v397 = vsub.s32 0, %v396
    %v398 = vrot.slane %v393, %v397
    %400 = vmatprep.subr.mxu0 %v71
    %401 = vmatpush1.xpose.msra.mxu0 %v70
    %402 = vmatprep.subr.mxu0 %v73
    %403 = vmatpush1.xpose.msra.mxu0 %v72
    %404 = vmatprep.subr.mxu0 %v75
    %405 = vmatpush1.xpose.msra.mxu0 %v74
    %406 = vmatprep.subr.mxu0 %v77
    %407 = vmatpush1.xpose.msra.mxu0 %v76
    %408 = vmatprep.subr.mxu0 %v79
    %409 = vmatpush1.xpose.msra.mxu0 %v78
    %410 = vmatprep.subr.mxu0 %v81
    %411 = vmatpush1.xpose.msra.mxu0 %v80
    %412 = vmatprep.subr.mxu0 %v83
    %413 = vmatpush1.xpose.msra.mxu0 %v82
    %414 = vmatprep.subr.mxu0 %v85
    %415 = vmatpush1.xpose.msra.mxu0 %v84
    %416 = vmatprep.subr.mxu0 %v87
    %417 = vmatpush1.xpose.msra.mxu0 %v86
    %418 = vmatprep.subr.mxu0 %v89
    %419 = vmatpush1.xpose.msra.mxu0 %v88
    %420 = vmatprep.subr.mxu0 %v91
    %421 = vmatpush1.xpose.msra.mxu0 %v90
    %422 = vmatprep.subr.mxu0 %v93
    %423 = vmatpush1.xpose.msra.mxu0 %v92
    %424 = vmatprep.subr.mxu0 %v95
    %425 = vmatpush1.xpose.msra.mxu0 %v94
    %426 = vmatprep.subr.mxu0 %v97
    %427 = vmatpush1.xpose.msra.mxu0 %v96
    %428 = vmatprep.subr.mxu0 %v99
    %429 = vmatpush1.xpose.msra.mxu0 %v98
    %430 = vmatprep.subr.mxu0 %v101
    %431 = vmatpush1.xpose.msra.mxu0 %v100
    %432 = vmatprep.subr.mxu0 0.0
    %433 = vmatpush1.xpose.msra.mxu0 0.0
    %434 = vmatprep.subr.mxu0 0.0
    %435 = vmatpush1.xpose.msra.mxu0 0.0
    %436 = vmatprep.subr.mxu0 0.0
    %437 = vmatpush1.xpose.msra.mxu0 0.0
    %438 = vmatprep.subr.mxu0 0.0
    %439 = vmatpush1.xpose.msra.mxu0 0.0
    %440 = vmatprep.subr.mxu0 0.0
    %441 = vmatpush1.xpose.msra.mxu0 0.0
    %442 = vmatprep.subr.mxu0 0.0
    %443 = vmatpush1.xpose.msra.mxu0 0.0
    %444 = vmatprep.subr.mxu0 0.0
    %445 = vmatpush1.xpose.msra.mxu0 0.0
    %446 = vmatprep.subr.mxu0 0.0
    %447 = vmatpush1.xpose.msra.mxu0 0.0
    %448 = vmatprep.subr.mxu0 0.0
    %449 = vmatpush1.xpose.msra.mxu0 0.0
    %450 = vmatprep.subr.mxu0 0.0
    %451 = vmatpush1.xpose.msra.mxu0 0.0
    %452 = vmatprep.subr.mxu0 0.0
    %453 = vmatpush1.xpose.msra.mxu0 0.0
    %454 = vmatprep.subr.mxu0 0.0
    %455 = vmatpush1.xpose.msra.mxu0 0.0
    %456 = vmatprep.subr.mxu0 0.0
    %457 = vmatpush1.xpose.msra.mxu0 0.0
    %458 = vmatprep.subr.mxu0 0.0
    %459 = vmatpush1.xpose.msra.mxu0 0.0
    %460 = vmatprep.subr.mxu0 0.0
    %461 = vmatpush1.xpose.msra.mxu0 0.0
    %462 = vmatprep.subr.mxu0 0.0
    %463 = vmatpush1.xpose.msra.mxu0 0.0
    %464 = vmatprep.mubr.f32.mxu0 %v392
    %465 = vmatmul.mubr.f32.gmra.mrb[0].mxu0 %v391
    %v466 = vpop.f32.mrb[0].mxu0
    %v467 = vadd.f32 %v398, %v466
    %v468 = vpop.f32.mrb[0].mxu0
    %469 = vdwg.mxu0
    %v470 = vmul.f32 %v467, 0.5
    %v471 = vtanh.pop %v470
    %v472 = vmul.f32 %v471, 0.5
    %v473 = vadd.f32 %v472, 0.5
    %474 = vst [vmem:[#allocation10] sm:$0xff] %v473
    // Predicated region
    $region34: #{tpu_custom_call.1} parent=1 // pred_check
      _
    $region35: #{tpu_custom_call.1} parent=1 // pred_check_branch
      %476 = sbr.rel (0) target = $region37
    $region36: #{tpu_custom_call.1} parent=1 // pred_region
      %s478 = ssub.s32 128, 128
      %479 = vsyncadd [#allocation4], %s478
      %s481 = sshll.u32 [#allocation10], 4
      %s482 = int_to_ptr.vmem [resolvable:$true] %s481
      %484 = dma.vmem_to_hbm [thread:$0]  %s482, 128, %s4, [#allocation4]
    $region37: #{tpu_custom_call.1} parent=1 // pred_fallthru
      _
    // Predicated region
    $region38: #{tpu_custom_call.1} parent=1 // pred_check
      _
    $region39: #{tpu_custom_call.1} parent=1 // pred_check_branch
      %486 = sbr.rel (0) target = $region41
    $region40: #{tpu_custom_call.1} parent=1 // pred_region
      %487 = dma.done [#allocation4], 128
    $region41: #{tpu_custom_call.1} parent=1 // pred_fallthru
      _
    %488 = vsyncpa [#allocation3], 1
    %489 = vsyncpa [#allocation6], 1
    %490 = vsyncpa [#allocation9], 1
    %491 = vsyncpa [#allocation4], 1

// kernel: tpu_custom_call.1
$region0: #{tpu_custom_call.1}
  #allocation0 [shape = 'u32[]', space=smem, size = 0x4, offset = 0x4, fixed_abs, tag = 'smem constant byte address 0x4 - core index']
  #allocation1 [shape = 'u32[144,128]{1,0:T(1,128)}', space=vmem, size = 0x12000, scoped, tag = 'internal scratch']
  %s0 = inlined_call_operand.hbm [shape: f32[8,128], index: 0, kind: input, shape index: {}]
  %s1 = inlined_call_operand.hbm [shape: f32[128,256], index: 1, kind: input, shape index: {}]
  %s2 = inlined_call_operand.hbm [shape: f32[256,128], index: 2, kind: input, shape index: {}]
  %s3 = inlined_call_operand.hbm [shape: f32[1,768], index: 3, kind: input, shape index: {}]
  %s4 = inlined_call_operand.hbm [shape: f32[8,128], index: 4, kind: output, shape index: {}]
  %s5 = sld [smem:[#allocation0]]
  $region42: #{tpu_custom_call.1} parent=0
    _
  %s7 = ssub.s32 1, %s5
  %s8 = scalar_select 0, %s7, %s5
  $region1: #{tpu_custom_call.1} parent=0
    #allocation2 [shape = 'u8[4096]{0}', space=vmem, size = 0x1000, scoped, tag = 'input window, operand 0, single buffered']
    #allocation3 [shape = 's32[1]{0}', space=sflag, size = 0x4, scoped, tag = 'scoped memory for tpu_custom_call.1']
    #allocation4 [shape = 's32[1]{0}', space=sflag, size = 0x4, scoped, tag = 'scoped memory for tpu_custom_call.1']
    #allocation5 [shape = 'u8[131072]{0}', space=vmem, size = 0x20000, scoped, tag = 'input window, operand 1, single buffered']
    #allocation6 [shape = 's32[1]{0}', space=sflag, size = 0x4, scoped, tag = 'scoped memory for tpu_custom_call.1']
    #allocation7 [shape = 'u8[131072]{0}', space=vmem, size = 0x20000, scoped, tag = 'input window, operand 2, single buffered']
    #allocation8 [shape = 'u8[3072]{0}', space=vmem, size = 0xc00, scoped, tag = 'input window, operand 3, single buffered']
    #allocation9 [shape = 's32[1]{0}', space=sflag, size = 0x4, scoped, tag = 'scoped memory for tpu_custom_call.1']
    #allocation10 [shape = 'u8[4096]{0}', space=vmem, size = 0x1000, scoped, tag = 'output window, operand 0, single buffered']
    %9 = vsyncpa [#allocation3], 0
    %10 = vsyncpa [#allocation6], 0
    %11 = vsyncpa [#allocation9], 0
    %12 = vsyncpa [#allocation4], 0
    // Predicated region
    $region2: #{tpu_custom_call.1} parent=1 // pred_check
      _
    $region3: #{tpu_custom_call.1} parent=1 // pred_check_branch
      %14 = sbr.rel (0) target = $region5
    $region4: #{tpu_custom_call.1} parent=1 // pred_region
      %s16 = ssub.s32 128, 128
      %17 = vsyncadd [#allocation3], %s16
      %s19 = sshll.u32 [#allocation2], 4
      %s20 = int_to_ptr.vmem [resolvable:$true] %s19
      %22 = dma.hbm_to_vmem [thread:$0]  %s0, 128, %s20, [#allocation3]
    $region5: #{tpu_custom_call.1} parent=1 // pred_fallthru
      _
    // Predicated region
    $region6: #{tpu_custom_call.1} parent=1 // pred_check
      _
    $region7: #{tpu_custom_call.1} parent=1 // pred_check_branch
      %24 = sbr.rel (0) target = $region9
    $region8: #{tpu_custom_call.1} parent=1 // pred_region
      %s26 = ssub.s32 4096, 4096
      %27 = vsyncadd [#allocation6], %s26
      %s28 = sshll.u32 [#allocation5], 4
      %s29 = int_to_ptr.vmem [resolvable:$true] %s28
      %34 = dma.hbm_to_vmem [thread:$0]  %s1, 4096, %s29, [#allocation6], 256, 256, 16
    $region9: #{tpu_custom_call.1} parent=1 // pred_fallthru
      _
    // Predicated region
    $region10: #{tpu_custom_call.1} parent=1 // pred_check
      _
    $region11: #{tpu_custom_call.1} parent=1 // pred_check_branch
      %36 = sbr.rel (0) target = $region13
    $region12: #{tpu_custom_call.1} parent=1 // pred_region
      %s38 = ssub.s32 4096, 4096
      %39 = vsyncadd [#allocation6], %s38
      %s40 = sshll.u32 [#allocation7], 4
      %s41 = int_to_ptr.vmem [resolvable:$true] %s40
      %46 = dma.hbm_to_vmem [thread:$0]  %s2, 4096, %s41, [#allocation6], 128, 128, 8
    $region13: #{tpu_custom_call.1} parent=1 // pred_fallthru
      _
    // Predicated region
    $region14: #{tpu_custom_call.1} parent=1 // pred_check
      _
    $region15: #{tpu_custom_call.1} parent=1 // pred_check_branch
      %48 = sbr.rel (0) target = $region17
    $region16: #{tpu_custom_call.1} parent=1 // pred_region
      %s50 = ssub.s32 96, 96
      %51 = vsyncadd [#allocation9], %s50
      %s53 = sshll.u32 [#allocation8], 4
      %s54 = int_to_ptr.vmem [resolvable:$true] %s53
      %56 = dma.hbm_to_vmem [thread:$0]  %s3, 96, %s54, [#allocation9]
    $region17: #{tpu_custom_call.1} parent=1 // pred_fallthru
      _
    // Predicated region
    $region18: #{tpu_custom_call.1} parent=1 // pred_check
      _
    $region19: #{tpu_custom_call.1} parent=1 // pred_check_branch
      %58 = sbr.rel (0) target = $region21
    $region20: #{tpu_custom_call.1} parent=1 // pred_region
      %59 = dma.done [#allocation3], 128
    $region21: #{tpu_custom_call.1} parent=1 // pred_fallthru
      _
    // Predicated region
    $region22: #{tpu_custom_call.1} parent=1 // pred_check
      _
    $region23: #{tpu_custom_call.1} parent=1 // pred_check_branch
      %61 = sbr.rel (0) target = $region25
    $region24: #{tpu_custom_call.1} parent=1 // pred_region
      %62 = dma.done [#allocation6], 4096
    $region25: #{tpu_custom_call.1} parent=1 // pred_fallthru
      _
    // Predicated region
    $region26: #{tpu_custom_call.1} parent=1 // pred_check
      _
    $region27: #{tpu_custom_call.1} parent=1 // pred_check_branch
      %64 = sbr.rel (0) target = $region29
    $region28: #{tpu_custom_call.1} parent=1 // pred_region
      %65 = dma.done [#allocation6], 4096
    $region29: #{tpu_custom_call.1} parent=1 // pred_fallthru
      _
    // Predicated region
    $region30: #{tpu_custom_call.1} parent=1 // pred_check
      _
    $region31: #{tpu_custom_call.1} parent=1 // pred_check_branch
      %67 = sbr.rel (0) target = $region33
    $region32: #{tpu_custom_call.1} parent=1 // pred_region
      %68 = dma.done [#allocation9], 96
    $region33: #{tpu_custom_call.1} parent=1 // pred_fallthru
      _
    %v69 = vld [vmem:[#allocation2] sm:$0xff]
    %v70 = vld [vmem:[#allocation5] sm:$0xff]
    %v71 = vld [vmem:[#allocation5 + $0x8] sm:$0xff]
    %v72 = vld [vmem:[#allocation5 + $0x10] sm:$0xff]
    %v73 = vld [vmem:[#allocation5 + $0x18] sm:$0xff]
    %v74 = vld [vmem:[#allocation5 + $0x20] sm:$0xff]
    %v75 = vld [vmem:[#allocation5 + $0x28] sm:$0xff]
    %v76 = vld [vmem:[#allocation5 + $0x30] sm:$0xff]
    %v77 = vld [vmem:[#allocation5 + $0x38] sm:$0xff]
    %v78 = vld [vmem:[#allocation5 + $0x40] sm:$0xff]
    %v79 = vld [vmem:[#allocation5 + $0x48] sm:$0xff]
    %v80 = vld [vmem:[#allocation5 + $0x50] sm:$0xff]
    %v81 = vld [vmem:[#allocation5 + $0x58] sm:$0xff]
    %v82 = vld [vmem:[#allocation5 + $0x60] sm:$0xff]
    %v83 = vld [vmem:[#allocation5 + $0x68] sm:$0xff]
    %v84 = vld [vmem:[#allocation5 + $0x70] sm:$0xff]
    %v85 = vld [vmem:[#allocation5 + $0x78] sm:$0xff]
    %v86 = vld [vmem:[#allocation5 + $0x80] sm:$0xff]
    %v87 = vld [vmem:[#allocation5 + $0x88] sm:$0xff]
    %v88 = vld [vmem:[#allocation5 + $0x90] sm:$0xff]
    %v89 = vld [vmem:[#allocation5 + $0x98] sm:$0xff]
    %v90 = vld [vmem:[#allocation5 + $0xa0] sm:$0xff]
    %v91 = vld [vmem:[#allocation5 + $0xa8] sm:$0xff]
    %v92 = vld [vmem:[#allocation5 + $0xb0] sm:$0xff]
    %v93 = vld [vmem:[#allocation5 + $0xb8] sm:$0xff]
    %v94 = vld [vmem:[#allocation5 + $0xc0] sm:$0xff]
    %v95 = vld [vmem:[#allocation5 + $0xc8] sm:$0xff]
    %v96 = vld [vmem:[#allocation5 + $0xd0] sm:$0xff]
    %v97 = vld [vmem:[#allocation5 + $0xd8] sm:$0xff]
    %v98 = vld [vmem:[#allocation5 + $0xe0] sm:$0xff]
    %v99 = vld [vmem:[#allocation5 + $0xe8] sm:$0xff]
    %v100 = vld [vmem:[#allocation5 + $0xf0] sm:$0xff]
    %v101 = vld [vmem:[#allocation5 + $0xf8] sm:$0xff]
    %v102 = vld [vmem:[#allocation8] sm:$0x3]
    %v104 = vlaneseq
    %v105 = vshrl.u32 %v104, 7
    %v106 = vsub.s32 0, %v105
    %v107 = vrot.slane %v102, %v106
    %v108 = vlaneseq
    %v109 = vshrl.u32 %v108, 7
    %v110 = vsub.s32 1, %v109
    %v111 = vrot.slane %v102, %v110
    %114 = vmatprep.subr.mxu0 %v71
    %115 = vmatpush1.msra.mxu0 %v70
    %116 = vmatprep.subr.mxu0 %v73
    %117 = vmatpush1.msra.mxu0 %v72
    %118 = vmatprep.subr.mxu0 %v75
    %119 = vmatpush1.msra.mxu0 %v74
    %120 = vmatprep.subr.mxu0 %v77
    %121 = vmatpush1.msra.mxu0 %v76
    %122 = vmatprep.subr.mxu0 %v79
    %123 = vmatpush1.msra.mxu0 %v78
    %124 = vmatprep.subr.mxu0 %v81
    %125 = vmatpush1.msra.mxu0 %v80
    %126 = vmatprep.subr.mxu0 %v83
    %127 = vmatpush1.msra.mxu0 %v82
    %128 = vmatprep.subr.mxu0 %v85
    %129 = vmatpush1.msra.mxu0 %v84
    %130 = vmatprep.subr.mxu0 %v87
    %131 = vmatpush1.msra.mxu0 %v86
    %132 = vmatprep.subr.mxu0 %v89
    %133 = vmatpush1.msra.mxu0 %v88
    %134 = vmatprep.subr.mxu0 %v91
    %135 = vmatpush1.msra.mxu0 %v90
    %136 = vmatprep.subr.mxu0 %v93
    %137 = vmatpush1.msra.mxu0 %v92
    %138 = vmatprep.subr.mxu0 %v95
    %139 = vmatpush1.msra.mxu0 %v94
    %140 = vmatprep.subr.mxu0 %v97
    %141 = vmatpush1.msra.mxu0 %v96
    %142 = vmatprep.subr.mxu0 %v99
    %143 = vmatpush1.msra.mxu0 %v98
    %144 = vmatprep.subr.mxu0 %v101
    %145 = vmatpush1.msra.mxu0 %v100
    %146 = vmatprep.subr.mxu0 0.0
    %147 = vmatpush1.msra.mxu0 0.0
    %148 = vmatprep.subr.mxu0 0.0
    %149 = vmatpush1.msra.mxu0 0.0
    %150 = vmatprep.subr.mxu0 0.0
    %151 = vmatpush1.msra.mxu0 0.0
    %152 = vmatprep.subr.mxu0 0.0
    %153 = vmatpush1.msra.mxu0 0.0
    %154 = vmatprep.subr.mxu0 0.0
    %155 = vmatpush1.msra.mxu0 0.0
    %156 = vmatprep.subr.mxu0 0.0
    %157 = vmatpush1.msra.mxu0 0.0
    %158 = vmatprep.subr.mxu0 0.0
    %159 = vmatpush1.msra.mxu0 0.0
    %160 = vmatprep.subr.mxu0 0.0
    %161 = vmatpush1.msra.mxu0 0.0
    %162 = vmatprep.subr.mxu0 0.0
    %163 = vmatpush1.msra.mxu0 0.0
    %164 = vmatprep.subr.mxu0 0.0
    %165 = vmatpush1.msra.mxu0 0.0
    %166 = vmatprep.subr.mxu0 0.0
    %167 = vmatpush1.msra.mxu0 0.0
    %168 = vmatprep.subr.mxu0 0.0
    %169 = vmatpush1.msra.mxu0 0.0
    %170 = vmatprep.subr.mxu0 0.0
    %171 = vmatpush1.msra.mxu0 0.0
    %172 = vmatprep.subr.mxu0 0.0
    %173 = vmatpush1.msra.mxu0 0.0
    %174 = vmatprep.subr.mxu0 0.0
    %175 = vmatpush1.msra.mxu0 0.0
    %176 = vmatprep.subr.mxu0 0.0
    %177 = vmatpush1.msra.mxu0 0.0
    %178 = vmatprep.mubr.f32.mxu0 0.0
    %179 = vmatmul.mubr.f32.gmra.mrb[0].mxu0 %v69
    %v180 = vpop.f32.mrb[0].mxu0
    %v181 = vadd.f32 %v107, %v180
    %v182 = vpop.f32.mrb[0].mxu0
    %v183 = vadd.f32 %v111, %v182
    %184 = vdwg.mxu0
    %v185 = vmul.f32 %v181, 0.5
    %v186 = vmul.f32 %v183, 0.5
    %v187 = vtanh.pop %v185
    %v188 = vtanh.pop %v186
    %v189 = vmul.f32 %v187, 0.5
    %v190 = vmul.f32 %v188, 0.5
    %v191 = vadd.f32 %v189, 0.5
    %v192 = vadd.f32 %v190, 0.5
    %v193 = vld [vmem:[#allocation7] sm:$0xff]
    %v194 = vld [vmem:[#allocation7 + $0x8] sm:$0xff]
    %v195 = vld [vmem:[#allocation7 + $0x10] sm:$0xff]
    %v196 = vld [vmem:[#allocation7 + $0x18] sm:$0xff]
    %v197 = vld [vmem:[#allocation7 + $0x20] sm:$0xff]
    %v198 = vld [vmem:[#allocation7 + $0x28] sm:$0xff]
    %v199 = vld [vmem:[#allocation7 + $0x30] sm:$0xff]
    %v200 = vld [vmem:[#allocation7 + $0x38] sm:$0xff]
    %v201 = vld [vmem:[#allocation7 + $0x40] sm:$0xff]
    %v202 = vld [vmem:[#allocation7 + $0x48] sm:$0xff]
    %v203 = vld [vmem:[#allocation7 + $0x50] sm:$0xff]
    %v204 = vld [vmem:[#allocation7 + $0x58] sm:$0xff]
    %v205 = vld [vmem:[#allocation7 + $0x60] sm:$0xff]
    %v206 = vld [vmem:[#allocation7 + $0x68] sm:$0xff]
    %v207 = vld [vmem:[#allocation7 + $0x70] sm:$0xff]
    %v208 = vld [vmem:[#allocation7 + $0x78] sm:$0xff]
    %v209 = vld [vmem:[#allocation7 + $0x80] sm:$0xff]
    %v210 = vld [vmem:[#allocation7 + $0x88] sm:$0xff]
    %v211 = vld [vmem:[#allocation7 + $0x90] sm:$0xff]
    %v212 = vld [vmem:[#allocation7 + $0x98] sm:$0xff]
    %v213 = vld [vmem:[#allocation7 + $0xa0] sm:$0xff]
    %v214 = vld [vmem:[#allocation7 + $0xa8] sm:$0xff]
    %v215 = vld [vmem:[#allocation7 + $0xb0] sm:$0xff]
    %v216 = vld [vmem:[#allocation7 + $0xb8] sm:$0xff]
    %v217 = vld [vmem:[#allocation7 + $0xc0] sm:$0xff]
    %v218 = vld [vmem:[#allocation7 + $0xc8] sm:$0xff]
    %v219 = vld [vmem:[#allocation7 + $0xd0] sm:$0xff]
    %v220 = vld [vmem:[#allocation7 + $0xd8] sm:$0xff]
    %v221 = vld [vmem:[#allocation7 + $0xe0] sm:$0xff]
    %v222 = vld [vmem:[#allocation7 + $0xe8] sm:$0xff]
    %v223 = vld [vmem:[#allocation7 + $0xf0] sm:$0xff]
    %v224 = vld [vmem:[#allocation7 + $0xf8] sm:$0xff]
    %v225 = vld [vmem:[#allocation8 + $0x2] sm:$0x1]
    %v227 = vlaneseq
    %v228 = vshrl.u32 %v227, 7
    %v229 = vsub.s32 0, %v228
    %v230 = vrot.slane %v225, %v229
    %232 = vmatprep.subr.mxu0 0.0
    %233 = vmatpush1.msra.mxu0 %v193
    %234 = vmatprep.subr.mxu0 0.0
    %235 = vmatpush1.msra.mxu0 %v194
    %236 = vmatprep.subr.mxu0 0.0
    %237 = vmatpush1.msra.mxu0 %v195
    %238 = vmatprep.subr.mxu0 0.0
    %239 = vmatpush1.msra.mxu0 %v196
    %240 = vmatprep.subr.mxu0 0.0
    %241 = vmatpush1.msra.mxu0 %v197
    %242 = vmatprep.subr.mxu0 0.0
    %243 = vmatpush1.msra.mxu0 %v198
    %244 = vmatprep.subr.mxu0 0.0
    %245 = vmatpush1.msra.mxu0 %v199
    %246 = vmatprep.subr.mxu0 0.0
    %247 = vmatpush1.msra.mxu0 %v200
    %248 = vmatprep.subr.mxu0 0.0
    %249 = vmatpush1.msra.mxu0 %v201
    %250 = vmatprep.subr.mxu0 0.0
    %251 = vmatpush1.msra.mxu0 %v202
    %252 = vmatprep.subr.mxu0 0.0
    %253 = vmatpush1.msra.mxu0 %v203
    %254 = vmatprep.subr.mxu0 0.0
    %255 = vmatpush1.msra.mxu0 %v204
    %256 = vmatprep.subr.mxu0 0.0
    %257 = vmatpush1.msra.mxu0 %v205
    %258 = vmatprep.subr.mxu0 0.0
    %259 = vmatpush1.msra.mxu0 %v206
    %260 = vmatprep.subr.mxu0 0.0
    %261 = vmatpush1.msra.mxu0 %v207
    %262 = vmatprep.subr.mxu0 0.0
    %263 = vmatpush1.msra.mxu0 %v208
    %264 = vmatprep.subr.mxu0 0.0
    %265 = vmatpush1.msra.mxu0 %v209
    %266 = vmatprep.subr.mxu0 0.0
    %267 = vmatpush1.msra.mxu0 %v210
    %268 = vmatprep.subr.mxu0 0.0
    %269 = vmatpush1.msra.mxu0 %v211
    %270 = vmatprep.subr.mxu0 0.0
    %271 = vmatpush1.msra.mxu0 %v212
    %272 = vmatprep.subr.mxu0 0.0
    %273 = vmatpush1.msra.mxu0 %v213
    %274 = vmatprep.subr.mxu0 0.0
    %275 = vmatpush1.msra.mxu0 %v214
    %276 = vmatprep.subr.mxu0 0.0
    %277 = vmatpush1.msra.mxu0 %v215
    %278 = vmatprep.subr.mxu0 0.0
    %279 = vmatpush1.msra.mxu0 %v216
    %280 = vmatprep.subr.mxu0 0.0
    %281 = vmatpush1.msra.mxu0 %v217
    %282 = vmatprep.subr.mxu0 0.0
    %283 = vmatpush1.msra.mxu0 %v218
    %284 = vmatprep.subr.mxu0 0.0
    %285 = vmatpush1.msra.mxu0 %v219
    %286 = vmatprep.subr.mxu0 0.0
    %287 = vmatpush1.msra.mxu0 %v220
    %288 = vmatprep.subr.mxu0 0.0
    %289 = vmatpush1.msra.mxu0 %v221
    %290 = vmatprep.subr.mxu0 0.0
    %291 = vmatpush1.msra.mxu0 %v222
    %292 = vmatprep.subr.mxu0 0.0
    %293 = vmatpush1.msra.mxu0 %v223
    %294 = vmatprep.subr.mxu0 0.0
    %295 = vmatpush1.msra.mxu0 %v224
    %296 = vmatprep.mubr.f32.mxu0 %v192
    %297 = vmatmul.mubr.f32.gmra.mrb[0].mxu0 %v191
    %v298 = vpop.f32.mrb[0].mxu0
    %v299 = vadd.f32 %v230, %v298
    %v300 = vpop.f32.mrb[0].mxu0
    %301 = vdwg.mxu0
    %v302 = vld [vmem:[#allocation8 + $0x3] sm:$0x3]
    %v304 = vlaneseq
    %v305 = vshrl.u32 %v304, 7
    %v306 = vsub.s32 0, %v305
    %v307 = vrot.slane %v302, %v306
    %v308 = vlaneseq
    %v309 = vshrl.u32 %v308, 7
    %v310 = vsub.s32 1, %v309
    %v311 = vrot.slane %v302, %v310
    %314 = vmatprep.subr.mxu0 0.0
    %315 = vmatpush1.xpose.msra.mxu0 %v193
    %316 = vmatprep.subr.mxu0 0.0
    %317 = vmatpush1.xpose.msra.mxu0 %v194
    %318 = vmatprep.subr.mxu0 0.0
    %319 = vmatpush1.xpose.msra.mxu0 %v195
    %320 = vmatprep.subr.mxu0 0.0
    %321 = vmatpush1.xpose.msra.mxu0 %v196
    %322 = vmatprep.subr.mxu0 0.0
    %323 = vmatpush1.xpose.msra.mxu0 %v197
    %324 = vmatprep.subr.mxu0 0.0
    %325 = vmatpush1.xpose.msra.mxu0 %v198
    %326 = vmatprep.subr.mxu0 0.0
    %327 = vmatpush1.xpose.msra.mxu0 %v199
    %328 = vmatprep.subr.mxu0 0.0
    %329 = vmatpush1.xpose.msra.mxu0 %v200
    %330 = vmatprep.subr.mxu0 0.0
    %331 = vmatpush1.xpose.msra.mxu0 %v201
    %332 = vmatprep.subr.mxu0 0.0
    %333 = vmatpush1.xpose.msra.mxu0 %v202
    %334 = vmatprep.subr.mxu0 0.0
    %335 = vmatpush1.xpose.msra.mxu0 %v203
    %336 = vmatprep.subr.mxu0 0.0
    %337 = vmatpush1.xpose.msra.mxu0 %v204
    %338 = vmatprep.subr.mxu0 0.0
    %339 = vmatpush1.xpose.msra.mxu0 %v205
    %340 = vmatprep.subr.mxu0 0.0
    %341 = vmatpush1.xpose.msra.mxu0 %v206
    %342 = vmatprep.subr.mxu0 0.0
    %343 = vmatpush1.xpose.msra.mxu0 %v207
    %344 = vmatprep.subr.mxu0 0.0
    %345 = vmatpush1.xpose.msra.mxu0 %v208
    %346 = vmatprep.subr.mxu0 0.0
    %347 = vmatpush1.xpose.msra.mxu0 %v209
    %348 = vmatprep.subr.mxu0 0.0
    %349 = vmatpush1.xpose.msra.mxu0 %v210
    %350 = vmatprep.subr.mxu0 0.0
    %351 = vmatpush1.xpose.msra.mxu0 %v211
    %352 = vmatprep.subr.mxu0 0.0
    %353 = vmatpush1.xpose.msra.mxu0 %v212
    %354 = vmatprep.subr.mxu0 0.0
    %355 = vmatpush1.xpose.msra.mxu0 %v213
    %356 = vmatprep.subr.mxu0 0.0
    %357 = vmatpush1.xpose.msra.mxu0 %v214
    %358 = vmatprep.subr.mxu0 0.0
    %359 = vmatpush1.xpose.msra.mxu0 %v215
    %360 = vmatprep.subr.mxu0 0.0
    %361 = vmatpush1.xpose.msra.mxu0 %v216
    %362 = vmatprep.subr.mxu0 0.0
    %363 = vmatpush1.xpose.msra.mxu0 %v217
    %364 = vmatprep.subr.mxu0 0.0
    %365 = vmatpush1.xpose.msra.mxu0 %v218
    %366 = vmatprep.subr.mxu0 0.0
    %367 = vmatpush1.xpose.msra.mxu0 %v219
    %368 = vmatprep.subr.mxu0 0.0
    %369 = vmatpush1.xpose.msra.mxu0 %v220
    %370 = vmatprep.subr.mxu0 0.0
    %371 = vmatpush1.xpose.msra.mxu0 %v221
    %372 = vmatprep.subr.mxu0 0.0
    %373 = vmatpush1.xpose.msra.mxu0 %v222
    %374 = vmatprep.subr.mxu0 0.0
    %375 = vmatpush1.xpose.msra.mxu0 %v223
    %376 = vmatprep.subr.mxu0 0.0
    %377 = vmatpush1.xpose.msra.mxu0 %v224
    %378 = vmatprep.mubr.f32.mxu0 0.0
    %379 = vmatmul.mubr.f32.gmra.mrb[0].mxu0 %v299
    %v380 = vpop.f32.mrb[0].mxu0
    %v381 = vadd.f32 %v307, %v380
    %v382 = vpop.f32.mrb[0].mxu0
    %v383 = vadd.f32 %v311, %v382
    %384 = vdwg.mxu0
    %v385 = vmul.f32 %v381, 0.5
    %v386 = vmul.f32 %v383, 0.5
    %v387 = vtanh.pop %v385
    %v388 = vtanh.pop %v386
    %v389 = vmul.f32 %v387, 0.5
    %v390 = vmul.f32 %v388, 0.5
    %v391 = vadd.f32 %v389, 0.5
    %v392 = vadd.f32 %v390, 0.5
    %v393 = vld [vmem:[#allocation8 + $0x5] sm:$0x1]
    %v395 = vlaneseq
    %v396 = vshrl.u32 %v395, 7
    %v397 = vsub.s32 0, %v396
    %v398 = vrot.slane %v393, %v397
    %400 = vmatprep.subr.mxu0 %v71
    %401 = vmatpush1.xpose.msra.mxu0 %v70
    %402 = vmatprep.subr.mxu0 %v73
    %403 = vmatpush1.xpose.msra.mxu0 %v72
    %404 = vmatprep.subr.mxu0 %v75
    %405 = vmatpush1.xpose.msra.mxu0 %v74
    %406 = vmatprep.subr.mxu0 %v77
    %407 = vmatpush1.xpose.msra.mxu0 %v76
    %408 = vmatprep.subr.mxu0 %v79
    %409 = vmatpush1.xpose.msra.mxu0 %v78
    %410 = vmatprep.subr.mxu0 %v81
    %411 = vmatpush1.xpose.msra.mxu0 %v80
    %412 = vmatprep.subr.mxu0 %v83
    %413 = vmatpush1.xpose.msra.mxu0 %v82
    %414 = vmatprep.subr.mxu0 %v85
    %415 = vmatpush1.xpose.msra.mxu0 %v84
    %416 = vmatprep.subr.mxu0 %v87
    %417 = vmatpush1.xpose.msra.mxu0 %v86
    %418 = vmatprep.subr.mxu0 %v89
    %419 = vmatpush1.xpose.msra.mxu0 %v88
    %420 = vmatprep.subr.mxu0 %v91
    %421 = vmatpush1.xpose.msra.mxu0 %v90
    %422 = vmatprep.subr.mxu0 %v93
    %423 = vmatpush1.xpose.msra.mxu0 %v92
    %424 = vmatprep.subr.mxu0 %v95
    %425 = vmatpush1.xpose.msra.mxu0 %v94
    %426 = vmatprep.subr.mxu0 %v97
    %427 = vmatpush1.xpose.msra.mxu0 %v96
    %428 = vmatprep.subr.mxu0 %v99
    %429 = vmatpush1.xpose.msra.mxu0 %v98
    %430 = vmatprep.subr.mxu0 %v101
    %431 = vmatpush1.xpose.msra.mxu0 %v100
    %432 = vmatprep.subr.mxu0 0.0
    %433 = vmatpush1.xpose.msra.mxu0 0.0
    %434 = vmatprep.subr.mxu0 0.0
    %435 = vmatpush1.xpose.msra.mxu0 0.0
    %436 = vmatprep.subr.mxu0 0.0
    %437 = vmatpush1.xpose.msra.mxu0 0.0
    %438 = vmatprep.subr.mxu0 0.0
    %439 = vmatpush1.xpose.msra.mxu0 0.0
    %440 = vmatprep.subr.mxu0 0.0
    %441 = vmatpush1.xpose.msra.mxu0 0.0
    %442 = vmatprep.subr.mxu0 0.0
    %443 = vmatpush1.xpose.msra.mxu0 0.0
    %444 = vmatprep.subr.mxu0 0.0
    %445 = vmatpush1.xpose.msra.mxu0 0.0
    %446 = vmatprep.subr.mxu0 0.0
    %447 = vmatpush1.xpose.msra.mxu0 0.0
    %448 = vmatprep.subr.mxu0 0.0
    %449 = vmatpush1.xpose.msra.mxu0 0.0
    %450 = vmatprep.subr.mxu0 0.0
    %451 = vmatpush1.xpose.msra.mxu0 0.0
    %452 = vmatprep.subr.mxu0 0.0
    %453 = vmatpush1.xpose.msra.mxu0 0.0
    %454 = vmatprep.subr.mxu0 0.0
    %455 = vmatpush1.xpose.msra.mxu0 0.0
    %456 = vmatprep.subr.mxu0 0.0
    %457 = vmatpush1.xpose.msra.mxu0 0.0
    %458 = vmatprep.subr.mxu0 0.0
    %459 = vmatpush1.xpose.msra.mxu0 0.0
    %460 = vmatprep.subr.mxu0 0.0
    %461 = vmatpush1.xpose.msra.mxu0 0.0
    %462 = vmatprep.subr.mxu0 0.0
    %463 = vmatpush1.xpose.msra.mxu0 0.0
    %464 = vmatprep.mubr.f32.mxu0 %v392
    %465 = vmatmul.mubr.f32.gmra.mrb[0].mxu0 %v391
    %v466 = vpop.f32.mrb[0].mxu0
    %v467 = vadd.f32 %v398, %v466
    %v468 = vpop.f32.mrb[0].mxu0
    %469 = vdwg.mxu0
    %v470 = vmul.f32 %v467, 0.5
    %v471 = vtanh.pop %v470
    %v472 = vmul.f32 %v471, 0.5
    %v473 = vadd.f32 %v472, 0.5
    %474 = vst [vmem:[#allocation10] sm:$0xff] %v473
    // Predicated region
    $region34: #{tpu_custom_call.1} parent=1 // pred_check
      _
    $region35: #{tpu_custom_call.1} parent=1 // pred_check_branch
      %476 = sbr.rel (0) target = $region37
    $region36: #{tpu_custom_call.1} parent=1 // pred_region
      %s478 = ssub.s32 128, 128
      %479 = vsyncadd [#allocation4], %s478
      %s481 = sshll.u32 [#allocation10], 4
      %s482 = int_to_ptr.vmem [resolvable:$true] %s481
      %484 = dma.vmem_to_hbm [thread:$0]  %s482, 128, %s4, [#allocation4]
    $region37: #{tpu_custom_call.1} parent=1 // pred_fallthru
      _
    // Predicated region
    $region38: #{tpu_custom_call.1} parent=1 // pred_check
      _
    $region39: #{tpu_custom_call.1} parent=1 // pred_check_branch
      %486 = sbr.rel (0) target = $region41
    $region40: #{tpu_custom_call.1} parent=1 // pred_region
      %487 = dma.done [#allocation4], 128
    $region41: #{tpu_custom_call.1} parent=1 // pred_fallthru
      _
    %488 = vsyncpa [#allocation3], 1
    %489 = vsyncpa [#allocation6], 1
    %490 = vsyncpa [#allocation9], 1
    %491 = vsyncpa [#allocation4], 1

</llo_original>
